<compile_context>
chip_gen: v6e
topology: v6e:2x2x1
jax: 0.10.0
libtpu: 0.0.40
codegen_flags: <defaults>
</compile_context>

<pallas_src>
import jax
import jax.numpy as jnp
from jax.experimental import pallas as pl
from jax.experimental.pallas import tpu as pltpu


# ----------------------------------------------------------------------------
# Fast path: View == metadata-only reshape (what torch .view lowers to).
# ----------------------------------------------------------------------------
def _resolve_view_dims(x, dims):
    vdims = []
    for i in dims:
        if i >= 0:
            vdims.append(x.shape[i])
        else:
            vdims.append(i)
    return tuple(vdims)


def view(x, *dims):
    """JAX equivalent of View(*dims).forward(x): zero-cost contiguous reshape."""
    return jnp.reshape(x, _resolve_view_dims(x, dims))


# ----------------------------------------------------------------------------
# Optional Pallas path: force a physically materialized contiguous copy via
# direct HBM->HBM DMA (no VMEM staging).
# ----------------------------------------------------------------------------
_MIN_CHUNK_BYTES = 512 * 1024   # don't bother splitting below ~0.5 MiB/chunk
_MAX_CHUNKS = 4                 # a handful of outstanding DMAs is plenty


def _flat_2d_shape(total):
    """Lane-dense (rows, lanes) factorization of `total`, or None."""
    for lanes in (1024, 512, 256, 128):
        if total % lanes == 0:
            return (total // lanes, lanes)
    return None


def _chunk_plan(leading, total_bytes, align):
    """Static (start, size) chunks along the leading axis, aligned starts."""
    k = max(1, min(_MAX_CHUNKS, total_bytes // _MIN_CHUNK_BYTES))
    base = -(-leading // k)                 # ceil-div
    base = max(align, -(-base // align) * align)  # round up to alignment
    plan = []
    start = 0
    while start < leading:
        size = min(base, leading - start)
        plan.append((start, size))
        start += size
    return plan


def _make_hbm_copy_kernel(plan):
    """Kernel: issue all chunk DMAs (HBM->HBM), then wait on all (overlapped)."""
    def kernel(x_hbm, o_hbm, sems):
        copies = []
        for idx, (start, size) in enumerate(plan):
            cp = pltpu.make_async_copy(
                x_hbm.at[pl.ds(start, size)],
                o_hbm.at[pl.ds(start, size)],
                sems.at[idx],
            )
            cp.start()
            copies.append(cp)
        for cp in copies:
            cp.wait()
    return kernel


def _pallas_hbm_copy(x_arr, plan):
    itemsize = jnp.dtype(x_arr.dtype).itemsize
    total_bytes = x_arr.size * itemsize
    return pl.pallas_call(
        _make_hbm_copy_kernel(plan),
        out_shape=jax.ShapeDtypeStruct(x_arr.shape, x_arr.dtype),
        in_specs=[pl.BlockSpec(memory_space=pl.ANY)],
        out_specs=pl.BlockSpec(memory_space=pl.ANY),
        scratch_shapes=[pltpu.SemaphoreType.DMA((len(plan),))],
        cost_estimate=pl.CostEstimate(
            flops=0, transcendentals=0, bytes_accessed=2 * total_bytes),
    )(x_arr)


def view_materialized(x, *dims):
    """Same semantics as view(), but forces a physical contiguous copy."""
    vdims = _resolve_view_dims(x, dims)
    if x.ndim == 0 or x.size == 0:
        # TODO(synk): degenerate scalar/empty inputs fall back to the metadata
        # reshape (nothing to copy).
        return jnp.reshape(x, vdims)

    itemsize = jnp.dtype(x.dtype).itemsize
    total = x.size
    total_bytes = total * itemsize

    flat2d = _flat_2d_shape(total)
    if flat2d is not None:
        # Lane-dense (rows, 128+) flat view; chunk along rows on 8-row
        # boundaries so every DMA region is tile-aligned and contiguous.
        flat = jnp.reshape(x, flat2d)                   # metadata only
        plan = _chunk_plan(flat2d[0], total_bytes, align=8)
        copied = _pallas_hbm_copy(flat, plan)
    else:
        # Awkward totals: a single whole-array HBM->HBM DMA in the original
        # shape (still zero VMEM, still bandwidth-bound).
        plan = [(0, x.shape[0])]
        copied = _pallas_hbm_copy(x, plan)

    return jnp.reshape(copied, vdims)


if __name__ == "__main__":
    key = jax.random.PRNGKey(0)
    k0, k1 = jax.random.split(key)

    # Small NCHW input; View(0, -1) flattens all non-batch dims.
    x = jax.random.normal(k0, (2, 4, 16, 16), dtype=jnp.float32)

    # Hot path: pure metadata reshape (what View should lower to).
    y = view(x, 0, -1)                       # -> shape (2, 1024)
    y = jax.block_until_ready(y)

    # Pallas copy path: single HBM->HBM DMA (array < 0.5 MiB -> 1 chunk).
    y_copy = view_materialized(x, 0, -1)
    y_copy = jax.block_until_ready(y_copy)

    y_ref = jnp.reshape(x, (x.shape[0], -1))
    assert y.shape == (2, 4 * 16 * 16), y.shape
    assert y_copy.shape == (2, 4 * 16 * 16), y_copy.shape
    assert y.dtype == x.dtype and y_copy.dtype == x.dtype
    assert bool(jnp.all(y == y_ref))
    assert bool(jnp.all(y_copy == y_ref))

    # Slightly larger input to exercise the multi-chunk overlapped-DMA path
    # (1 MiB -> 2 chunks).
    x2 = jax.random.normal(k1, (8, 128, 256), dtype=jnp.float32)
    y2 = jax.block_until_ready(view(x2, 0, -1))
    y2_copy = jax.block_until_ready(view_materialized(x2, 0, -1))
    y2_ref = jnp.reshape(x2, (x2.shape[0], -1))
    assert y2.shape == (8, 128 * 256) and y2_copy.shape == (8, 128 * 256)
    assert bool(jnp.all(y2 == y2_ref))
    assert bool(jnp.all(y2_copy == y2_ref))

    print("KERNEL_OK")
</pallas_src>

<mosaic_0001>
module attributes {stable_mosaic.version = 11 : i64} {
  func.func @kernel(%arg0: memref<2x1024xf32, #tpu.memory_space<any>>, %arg1: memref<2x1024xf32, #tpu.memory_space<any>>, %arg2: memref<1x!tpu.dma_semaphore, #tpu.memory_space<semaphore_mem>>) attributes {dimension_semantics = [], scalar_prefetch = 0 : i64, scratch_operands = 1 : i64, tpu.core_type = #tpu.core_type<tc>} {
    %c0_i32 = arith.constant 0 : i32
    %c0_i32_0 = arith.constant 0 : i32
    %c0_i32_1 = arith.constant 0 : i32
    %0 = tpu.memref_slice %arg0[%c0_i32_0, %c0_i32_1] : memref<2x1024xf32, #tpu.memory_space<any>> -> memref<2x1024xf32, #tpu.memory_space<any>>
    %c0_i32_2 = arith.constant 0 : i32
    %c0_i32_3 = arith.constant 0 : i32
    %1 = tpu.memref_slice %arg1[%c0_i32_2, %c0_i32_3] : memref<2x1024xf32, #tpu.memory_space<any>> -> memref<2x1024xf32, #tpu.memory_space<any>>
    %2 = tpu.memref_slice %arg2[%c0_i32] : memref<1x!tpu.dma_semaphore, #tpu.memory_space<semaphore_mem>> -> memref<1x!tpu.dma_semaphore, #tpu.memory_space<semaphore_mem>>
    %3 = tpu.memref_squeeze %2 : memref<1x!tpu.dma_semaphore, #tpu.memory_space<semaphore_mem>> -> memref<!tpu.dma_semaphore, #tpu.memory_space<semaphore_mem>>
    tpu.enqueue_dma source(%0 : memref<2x1024xf32, #tpu.memory_space<any>>) target(%1 : memref<2x1024xf32, #tpu.memory_space<any>>) target_semaphore(%3 : memref<!tpu.dma_semaphore, #tpu.memory_space<semaphore_mem>>)
    %c0_i32_4 = arith.constant 0 : i32
    %c0_i32_5 = arith.constant 0 : i32
    %c0_i32_6 = arith.constant 0 : i32
    %4 = tpu.memref_slice %arg0[%c0_i32_5, %c0_i32_6] : memref<2x1024xf32, #tpu.memory_space<any>> -> memref<2x1024xf32, #tpu.memory_space<any>>
    %c0_i32_7 = arith.constant 0 : i32
    %c0_i32_8 = arith.constant 0 : i32
    %5 = tpu.memref_slice %arg1[%c0_i32_7, %c0_i32_8] : memref<2x1024xf32, #tpu.memory_space<any>> -> memref<2x1024xf32, #tpu.memory_space<any>>
    %6 = tpu.memref_slice %arg2[%c0_i32_4] : memref<1x!tpu.dma_semaphore, #tpu.memory_space<semaphore_mem>> -> memref<1x!tpu.dma_semaphore, #tpu.memory_space<semaphore_mem>>
    %7 = tpu.memref_squeeze %6 : memref<1x!tpu.dma_semaphore, #tpu.memory_space<semaphore_mem>> -> memref<!tpu.dma_semaphore, #tpu.memory_space<semaphore_mem>>
    tpu.wait_dma2 semaphore(%7 : memref<!tpu.dma_semaphore, #tpu.memory_space<semaphore_mem>>) src(%4 : memref<2x1024xf32, #tpu.memory_space<any>>) dst(%5 : memref<2x1024xf32, #tpu.memory_space<any>>)
    return
  }
}

</mosaic_0001>

<llo_original>
// kernel: tpu_custom_call.1
$region0: #{tpu_custom_call.1}
  #allocation0 [shape = 'u32[]', space=smem, size = 0x4, offset = 0x4, fixed_abs, tag = 'smem constant byte address 0x4 - core index']
  #allocation1 [shape = 'u32[144,128]{1,0:T(1,128)}', space=vmem, size = 0x12000, scoped, tag = 'internal scratch']
  #allocation2 [shape = 's32[1]{0}', space=sflag, size = 0x4, scoped, tag = 'scratch operand']
  #allocation3 [shape = 's32[]', space=sflag, size = 0x4, offset = 0, fixed_abs, tag = 'sflag constant byte address 0x0 - dummy sync flag']
  #allocation4 [shape = 'u32[0]{0}', space=smem, size = 0, offset = 0, fixed_abs, tag = 'smem constant byte address 0x0 - null']
  %s0 = inlined_call_operand.hbm [shape: f32[2,1024], index: 0, kind: input, shape index: {}]
  %s1 = inlined_call_operand.hbm [shape: f32[2,1024], index: 1, kind: output, shape index: {}]
  %s2 = sld [smem:[#allocation0]]
  $region2: #{tpu_custom_call.1} parent=0
    _
  %s4 = ssub.s32 1, %s2
  %s5 = scalar_select 0, %s4, %s2
  %s7 = sshll.u32 1, 14
  %s8 = sxor.u32 4294967295, %s7
  %12 = dma.general %s0, 256, %s1, [#allocation2], 131072, [#allocation4], 0, 0
  %s13 = smul.u32 2, 1
  %s14 = smul.u32 %s13, 8
  %s15 = sshll.u32 %s14, 4
  %16 = dma.done [#allocation2], %s15
  %17 = vsyncmov [#allocation2]
  %s18 = vpop.sfrf %17
  %p19 = scmp.eq.s32.totalorder %s18, 0
  %p20 = pneg %p19
  %22 = shalt.err (%p20)

</llo_original>
